<compile_context>
chip_gen: v5e
topology: v5e:2x2
jax: 0.10.0
libtpu: 0.0.40
codegen_flags: <defaults>
</compile_context>

<pallas_src>
import functools

import jax
import jax.numpy as jnp
from jax.experimental import pallas as pl
from jax.experimental.pallas import tpu as pltpu

_LANE = 128          # lane-padded width for layer 3 output / layer 4 input
_H1, _H2, _H3 = 512, 256, 64


def _round_up(x, m):
    return ((x + m - 1) // m) * m


def _default_bf16_epilogue():
    """bf16 VALU exists on v6e (Trillium) and v7x; not on v2-v5."""
    try:
        kind = jax.devices()[0].device_kind.lower()
    except Exception:
        return False
    return not any(t in kind for t in ("v2", "v3", "v4", "v5"))


def critic_kernel(x_ref,
                  w1_ref, b1_ref,
                  w2_ref, b2_ref,
                  w3_ref, b3_ref,
                  w4_ref, b4_ref,
                  o_ref, *, bf16_epilogue):
    """Fused 4-layer MLP forward for one batch tile (all weights resident in VMEM).

    Matmuls take bf16 operands and accumulate in f32 on the MXU.  Bias-add /
    ReLU run in bf16 on gens with a bf16 VPU, else f32.  The final 64->1 head
    is a VPU multiply + XLU lane reduce emitting a compact (tb, 1) result.
    """
    ep = jnp.bfloat16 if bf16_epilogue else jnp.float32

    x = x_ref[...].astype(jnp.bfloat16)

    h1 = jnp.dot(x, w1_ref[...], preferred_element_type=jnp.float32)
    h1 = jnp.maximum(h1.astype(ep) + b1_ref[...].astype(ep), 0.0).astype(jnp.bfloat16)

    h2 = jnp.dot(h1, w2_ref[...], preferred_element_type=jnp.float32)
    h2 = jnp.maximum(h2.astype(ep) + b2_ref[...].astype(ep), 0.0).astype(jnp.bfloat16)

    h3 = jnp.dot(h2, w3_ref[...], preferred_element_type=jnp.float32)
    h3 = jnp.maximum(h3.astype(ep) + b3_ref[...].astype(ep), 0.0)   # (tb, 128) lane-dense

    # Final head: real width 64, lanes 64..127 are exact zeros (zero-padded w3/b3
    # through ReLU and zero-padded w4 row), so the full-lane product is exact.
    v = jnp.sum(h3.astype(jnp.float32) * w4_ref[...], axis=-1, keepdims=True)
    o_ref[...] = v + b4_ref[...]                                    # (tb, 1) f32


@functools.partial(jax.jit, static_argnames=("batch_tile", "bf16_epilogue"))
def critic_forward(state, dev_params, *, batch_tile=512, bf16_epilogue=None):
    """state: (B, in_dim) float32 or bfloat16.  dev_params: prepare_params() output.

    Returns (B, 1) float32 value estimates.
    """
    if bf16_epilogue is None:
        bf16_epilogue = _default_bf16_epilogue()     # resolved at trace time (static)

    B, in_dim = state.shape
    w1, b1 = dev_params["w1"], dev_params["b1"]
    w2, b2 = dev_params["w2"], dev_params["b2"]
    w3, b3 = dev_params["w3"], dev_params["b3"]
    w4, b4 = dev_params["w4"], dev_params["b4"]

    assert batch_tile % 8 == 0, "batch_tile must be a multiple of 8 (128 recommended)"
    if B > batch_tile:
        tb = batch_tile
    elif B >= 128:
        # Split mid-size batches into 2 grid steps so both v7x TensorCores get
        # work (parallel grid axis); on v5e/v6e the extra step is negligible.
        tb = _round_up(-(-B // 2), 8)
    else:
        tb = B                      # single block covering the small batch
    grid = (pl.cdiv(B, tb),)

    # Weights/biases are small (< 1 MB total) so they live fully in VMEM and
    # their block index never changes across the grid (revisited, not re-DMA'd).
    full = lambda arr: pl.BlockSpec(arr.shape, lambda i: (0, 0))

    # Advisory cost for XLA's scheduler.
    flops = 2 * B * (in_dim * _H1 + _H1 * _H2 + _H2 * _LANE + _LANE)
    bytes_accessed = (
        state.size * state.dtype.itemsize
        + sum(a.size * a.dtype.itemsize
              for a in (w1, b1, w2, b2, w3, b3, w4, b4))
        + B * 4)                                     # compact (B, 1) f32 output
    cost = pl.CostEstimate(flops=flops, transcendentals=0,
                           bytes_accessed=bytes_accessed)

    kernel = functools.partial(critic_kernel, bf16_epilogue=bf16_epilogue)

    out = pl.pallas_call(
        kernel,
        out_shape=jax.ShapeDtypeStruct((B, 1), jnp.float32),
        grid_spec=pltpu.PrefetchScalarGridSpec(
            num_scalar_prefetch=0,
            grid=grid,
            in_specs=[
                pl.BlockSpec((tb, in_dim), lambda i: (i, 0)),   # state tile
                full(w1), full(b1),
                full(w2), full(b2),
                full(w3), full(b3),
                full(w4), full(b4),
            ],
            out_specs=pl.BlockSpec((tb, 1), lambda i: (i, 0)),  # compact result
        ),
        compiler_params=pltpu.CompilerParams(
            dimension_semantics=("parallel",)),
        cost_estimate=cost,
    )(state, w1, b1, w2, b2, w3, b3, w4, b4)

    return out


def init_params(key, in_dim):
    """Deterministic init mimicking PyTorch Linear: U(-1/sqrt(fan_in), 1/sqrt(fan_in)).

    Weights are (in, out), biases (1, out), all float32 (master copy)."""
    dims = [(in_dim, _H1), (_H1, _H2), (_H2, _H3), (_H3, 1)]
    params = {}
    for idx, (fan_in, fan_out) in enumerate(dims, start=1):
        key, kw, kb = jax.random.split(key, 3)
        bound = 1.0 / jnp.sqrt(jnp.float32(fan_in))
        params[f"w{idx}"] = jax.random.uniform(
            kw, (fan_in, fan_out), jnp.float32, minval=-bound, maxval=bound)
        params[f"b{idx}"] = jax.random.uniform(
            kb, (1, fan_out), jnp.float32, minval=-bound, maxval=bound)
    return params


def prepare_params(params):
    """Build the kernel-side parameter set.

    - w1/w2/w3 in bf16 (MXU-native); layer-3 output zero-padded 64 -> 128 lanes
      (exact no-op through ReLU since the padded bias is also zero).
    - w4 kept f32 as a zero-padded (1, 128) row (it feeds the VPU head, not the MXU).
    - biases f32 (cast per-tile in-kernel when the bf16 epilogue is active).
    """
    w3 = jnp.pad(params["w3"], ((0, 0), (0, _LANE - _H3)))          # (256, 128)
    b3 = jnp.pad(params["b3"], ((0, 0), (0, _LANE - _H3)))          # (1, 128)
    w4_row = jnp.pad(params["w4"].T, ((0, 0), (0, _LANE - _H3)))    # (1, 128) f32
    return {
        "w1": params["w1"].astype(jnp.bfloat16),
        "w2": params["w2"].astype(jnp.bfloat16),
        "w3": w3.astype(jnp.bfloat16),
        "w4": w4_row,
        "b1": params["b1"],
        "b2": params["b2"],
        "b3": b3,
        "b4": params["b4"],                                         # (1, 1) f32
    }


def reference_forward(state, params):
    """Pure-f32 XLA reference (matches the PyTorch module exactly)."""
    h = jnp.maximum(state @ params["w1"] + params["b1"], 0.0)
    h = jnp.maximum(h @ params["w2"] + params["b2"], 0.0)
    h = jnp.maximum(h @ params["w3"] + params["b3"], 0.0)
    return h @ params["w4"] + params["b4"]


def reference_forward_bf16(state, params):
    """XLA reference with the same bf16-operand / f32-accumulate matmul recipe."""
    def lin(x, w, b):
        return jnp.dot(x.astype(jnp.bfloat16), w.astype(jnp.bfloat16),
                       preferred_element_type=jnp.float32) + b
    h = jnp.maximum(lin(state, params["w1"], params["b1"]), 0.0)
    h = jnp.maximum(lin(h, params["w2"], params["b2"]), 0.0)
    h = jnp.maximum(lin(h, params["w3"], params["b3"]), 0.0)
    return lin(h, params["w4"], params["b4"])


if __name__ == "__main__":
    key = jax.random.PRNGKey(0)
    key, k_state = jax.random.split(key)

    batch, in_dim = 8, 32          # input_dims = (32,)
    state = jax.random.normal(k_state, (batch, in_dim), jnp.float32)

    params = init_params(key, in_dim)
    dev_params = prepare_params(params)

    # Small-batch single-tile path; state cast to bf16 once upstream (halves DMA,
    # numerically identical since the kernel casts the first dot input to bf16).
    value = critic_forward(state.astype(jnp.bfloat16), dev_params)
    value = jax.block_until_ready(value)
    assert value.shape == (batch, 1)

    ref_bf16 = reference_forward_bf16(state, params)
    ref_f32 = reference_forward(state, params)
    assert jnp.allclose(value, ref_bf16, atol=2e-2, rtol=2e-2), "mismatch vs bf16 reference"
    assert jnp.allclose(value, ref_f32, atol=5e-2, rtol=5e-2), "mismatch vs f32 reference"

    # Mid-size batch: exercises the 2-way split (grid=2, both v7x TCs busy).
    key, k_big = jax.random.split(key)
    big_state = jax.random.normal(k_big, (384, in_dim), jnp.float32)
    big_value = jax.block_until_ready(
        critic_forward(big_state.astype(jnp.bfloat16), dev_params))
    assert big_value.shape == (384, 1)
    assert jnp.allclose(big_value, reference_forward_bf16(big_state, params),
                        atol=2e-2, rtol=2e-2), "mismatch vs bf16 reference (split)"

    # Explicit multi-tile path (grid=3) with a deliberately small tile.
    tiled_value = jax.block_until_ready(
        critic_forward(big_state.astype(jnp.bfloat16), dev_params, batch_tile=128))
    assert tiled_value.shape == (384, 1)
    assert jnp.allclose(tiled_value, reference_forward_bf16(big_state, params),
                        atol=2e-2, rtol=2e-2), "mismatch vs bf16 reference (tiled)"

    print("KERNEL_OK")
</pallas_src>

<mosaic_0001>
module attributes {stable_mosaic.version = 11 : i64} {
  func.func @critic_kernel(%arg0: i32, %arg1: memref<8x32xbf16, #tpu.memory_space<vmem>>, %arg2: memref<32x512xbf16, #tpu.memory_space<vmem>>, %arg3: memref<1x512xf32, #tpu.memory_space<vmem>>, %arg4: memref<512x256xbf16, #tpu.memory_space<vmem>>, %arg5: memref<1x256xf32, #tpu.memory_space<vmem>>, %arg6: memref<256x128xbf16, #tpu.memory_space<vmem>>, %arg7: memref<1x128xf32, #tpu.memory_space<vmem>>, %arg8: memref<1x128xf32, #tpu.memory_space<vmem>>, %arg9: memref<1x1xf32, #tpu.memory_space<vmem>>, %arg10: memref<8x1xf32, #tpu.memory_space<vmem>>) attributes {dimension_semantics = [#tpu.dimension_semantics<parallel>], iteration_bounds = array<i64: 1>, scalar_prefetch = 0 : i64, scratch_operands = 0 : i64, tpu.core_type = #tpu.core_type<tc>, window_params = [{transform_indices = @transform_0, window_bounds = array<i64: 8, 32>}, {pipeline_mode = #tpu.pipeline_mode<synchronous>, transform_indices = @transform_1, window_bounds = array<i64: 32, 512>}, {pipeline_mode = #tpu.pipeline_mode<synchronous>, transform_indices = @transform_2, window_bounds = array<i64: 1, 512>}, {pipeline_mode = #tpu.pipeline_mode<synchronous>, transform_indices = @transform_3, window_bounds = array<i64: 512, 256>}, {pipeline_mode = #tpu.pipeline_mode<synchronous>, transform_indices = @transform_4, window_bounds = array<i64: 1, 256>}, {pipeline_mode = #tpu.pipeline_mode<synchronous>, transform_indices = @transform_5, window_bounds = array<i64: 256, 128>}, {pipeline_mode = #tpu.pipeline_mode<synchronous>, transform_indices = @transform_6, window_bounds = array<i64: 1, 128>}, {pipeline_mode = #tpu.pipeline_mode<synchronous>, transform_indices = @transform_7, window_bounds = array<i64: 1, 128>}, {pipeline_mode = #tpu.pipeline_mode<synchronous>, transform_indices = @transform_8, window_bounds = array<i64: 1, 1>}, {transform_indices = @transform_9, window_bounds = array<i64: 8, 1>}]} {
    %c0 = arith.constant 0 : index
    %c0_0 = arith.constant 0 : index
    %0 = vector.load %arg1[%c0, %c0_0] : memref<8x32xbf16, #tpu.memory_space<vmem>>, vector<8x32xbf16>
    %c0_1 = arith.constant 0 : index
    %c0_2 = arith.constant 0 : index
    %1 = vector.load %arg2[%c0_1, %c0_2] : memref<32x512xbf16, #tpu.memory_space<vmem>>, vector<32x512xbf16>
    %cst = arith.constant dense<0.000000e+00> : vector<8x512xf32>
    %2 = tpu.matmul %0, %1, %cst {dimension_numbers = #tpu.dot_dimension_numbers<[1], [0], [0], [1], [0, 0, 1, 1], [], []>} : vector<8x32xbf16>, vector<32x512xbf16>, vector<8x512xf32> -> vector<8x512xf32>
    %3 = arith.truncf %2 : vector<8x512xf32> to vector<8x512xbf16>
    %c0_3 = arith.constant 0 : index
    %c0_4 = arith.constant 0 : index
    %4 = vector.load %arg3[%c0_3, %c0_4] : memref<1x512xf32, #tpu.memory_space<vmem>>, vector<1x512xf32>
    %5 = arith.truncf %4 : vector<1x512xf32> to vector<1x512xbf16>
    %6 = vector.broadcast %5 : vector<1x512xbf16> to vector<8x512xbf16>
    %7 = arith.addf %3, %6 : vector<8x512xbf16>
    %cst_5 = arith.constant 0.000000e+00 : bf16
    %8 = vector.broadcast %cst_5 : bf16 to vector<8x512xbf16>
    %9 = arith.maximumf %7, %8 : vector<8x512xbf16>
    %c0_6 = arith.constant 0 : index
    %c0_7 = arith.constant 0 : index
    %10 = vector.load %arg4[%c0_6, %c0_7] : memref<512x256xbf16, #tpu.memory_space<vmem>>, vector<512x256xbf16>
    %cst_8 = arith.constant dense<0.000000e+00> : vector<8x256xf32>
    %11 = tpu.matmul %9, %10, %cst_8 {dimension_numbers = #tpu.dot_dimension_numbers<[1], [0], [0], [1], [0, 0, 1, 1], [], []>} : vector<8x512xbf16>, vector<512x256xbf16>, vector<8x256xf32> -> vector<8x256xf32>
    %12 = arith.truncf %11 : vector<8x256xf32> to vector<8x256xbf16>
    %c0_9 = arith.constant 0 : index
    %c0_10 = arith.constant 0 : index
    %13 = vector.load %arg5[%c0_9, %c0_10] : memref<1x256xf32, #tpu.memory_space<vmem>>, vector<1x256xf32>
    %14 = arith.truncf %13 : vector<1x256xf32> to vector<1x256xbf16>
    %15 = vector.broadcast %14 : vector<1x256xbf16> to vector<8x256xbf16>
    %16 = arith.addf %12, %15 : vector<8x256xbf16>
    %cst_11 = arith.constant 0.000000e+00 : bf16
    %17 = vector.broadcast %cst_11 : bf16 to vector<8x256xbf16>
    %18 = arith.maximumf %16, %17 : vector<8x256xbf16>
    %c0_12 = arith.constant 0 : index
    %c0_13 = arith.constant 0 : index
    %19 = vector.load %arg6[%c0_12, %c0_13] : memref<256x128xbf16, #tpu.memory_space<vmem>>, vector<256x128xbf16>
    %cst_14 = arith.constant dense<0.000000e+00> : vector<8x128xf32>
    %20 = tpu.matmul %18, %19, %cst_14 {dimension_numbers = #tpu.dot_dimension_numbers<[1], [0], [0], [1], [0, 0, 1, 1], [], []>} : vector<8x256xbf16>, vector<256x128xbf16>, vector<8x128xf32> -> vector<8x128xf32>
    %21 = arith.truncf %20 : vector<8x128xf32> to vector<8x128xbf16>
    %c0_15 = arith.constant 0 : index
    %c0_16 = arith.constant 0 : index
    %22 = vector.load %arg7[%c0_15, %c0_16] : memref<1x128xf32, #tpu.memory_space<vmem>>, vector<1x128xf32>
    %23 = arith.truncf %22 : vector<1x128xf32> to vector<1x128xbf16>
    %24 = vector.broadcast %23 : vector<1x128xbf16> to vector<8x128xbf16>
    %25 = arith.addf %21, %24 : vector<8x128xbf16>
    %cst_17 = arith.constant 0.000000e+00 : bf16
    %26 = vector.broadcast %cst_17 : bf16 to vector<8x128xbf16>
    %27 = arith.maximumf %25, %26 : vector<8x128xbf16>
    %28 = arith.extf %27 : vector<8x128xbf16> to vector<8x128xf32>
    %c0_18 = arith.constant 0 : index
    %c0_19 = arith.constant 0 : index
    %29 = vector.load %arg8[%c0_18, %c0_19] : memref<1x128xf32, #tpu.memory_space<vmem>>, vector<1x128xf32>
    %30 = vector.broadcast %29 : vector<1x128xf32> to vector<8x128xf32>
    %31 = arith.mulf %28, %30 : vector<8x128xf32>
    %cst_20 = arith.constant dense<0.000000e+00> : vector<8xf32>
    %32 = vector.multi_reduction <add>, %31, %cst_20 [1] : vector<8x128xf32> to vector<8xf32>
    %33 = vector.shape_cast %32 : vector<8xf32> to vector<8x1xf32>
    %c0_21 = arith.constant 0 : index
    %c0_22 = arith.constant 0 : index
    %34 = vector.load %arg9[%c0_21, %c0_22] : memref<1x1xf32, #tpu.memory_space<vmem>>, vector<1x1xf32>
    %35 = vector.broadcast %34 : vector<1x1xf32> to vector<8x1xf32>
    %36 = arith.addf %33, %35 : vector<8x1xf32>
    %c0_23 = arith.constant 0 : index
    %c0_24 = arith.constant 0 : index
    %37 = vector.load %arg10[%c0_23, %c0_24] : memref<8x1xf32, #tpu.memory_space<vmem>>, vector<8x1xf32>
    tpu.vector_store %arg10[%c0_23, %c0_24], %36 {strides = array<i32>} : memref<8x1xf32, #tpu.memory_space<vmem>>, vector<8x1xf32>,
    return
  }
  func.func @transform_0(%arg0: i32) -> (i32, i32) {
    %c0_i32 = arith.constant 0 : i32
    %c0_i32_0 = arith.constant 0 : i32
    return %arg0, %c0_i32 : i32, i32
  }
  func.func @transform_1(%arg0: i32) -> (i32, i32) {
    %c0_i32 = arith.constant 0 : i32
    %c0_i32_0 = arith.constant 0 : i32
    %c0_i32_1 = arith.constant 0 : i32
    return %c0_i32, %c0_i32_0 : i32, i32
  }
  func.func @transform_2(%arg0: i32) -> (i32, i32) {
    %c0_i32 = arith.constant 0 : i32
    %c0_i32_0 = arith.constant 0 : i32
    %c0_i32_1 = arith.constant 0 : i32
    return %c0_i32, %c0_i32_0 : i32, i32
  }
  func.func @transform_3(%arg0: i32) -> (i32, i32) {
    %c0_i32 = arith.constant 0 : i32
    %c0_i32_0 = arith.constant 0 : i32
    %c0_i32_1 = arith.constant 0 : i32
    return %c0_i32, %c0_i32_0 : i32, i32
  }
  func.func @transform_4(%arg0: i32) -> (i32, i32) {
    %c0_i32 = arith.constant 0 : i32
    %c0_i32_0 = arith.constant 0 : i32
    %c0_i32_1 = arith.constant 0 : i32
    return %c0_i32, %c0_i32_0 : i32, i32
  }
  func.func @transform_5(%arg0: i32) -> (i32, i32) {
    %c0_i32 = arith.constant 0 : i32
    %c0_i32_0 = arith.constant 0 : i32
    %c0_i32_1 = arith.constant 0 : i32
    return %c0_i32, %c0_i32_0 : i32, i32
  }
  func.func @transform_6(%arg0: i32) -> (i32, i32) {
    %c0_i32 = arith.constant 0 : i32
    %c0_i32_0 = arith.constant 0 : i32
    %c0_i32_1 = arith.constant 0 : i32
    return %c0_i32, %c0_i32_0 : i32, i32
  }
  func.func @transform_7(%arg0: i32) -> (i32, i32) {
    %c0_i32 = arith.constant 0 : i32
    %c0_i32_0 = arith.constant 0 : i32
    %c0_i32_1 = arith.constant 0 : i32
    return %c0_i32, %c0_i32_0 : i32, i32
  }
  func.func @transform_8(%arg0: i32) -> (i32, i32) {
    %c0_i32 = arith.constant 0 : i32
    %c0_i32_0 = arith.constant 0 : i32
    %c0_i32_1 = arith.constant 0 : i32
    return %c0_i32, %c0_i32_0 : i32, i32
  }
  func.func @transform_9(%arg0: i32) -> (i32, i32) {
    %c0_i32 = arith.constant 0 : i32
    %c0_i32_0 = arith.constant 0 : i32
    return %arg0, %c0_i32 : i32, i32
  }
}

</mosaic_0001>

<llo_original>
// kernel: critic_forward.1
$region0: #{critic_forward.1}
  #allocation0 [shape = 'u32[]', space=smem, size = 0x4, offset = 0x4, fixed_abs, tag = 'smem constant byte address 0x4 - core index']
  #allocation1 [shape = 'u32[72,128]{1,0:T(1,128)}', space=vmem, size = 0x9000, scoped, tag = 'internal scratch']
  #allocation2 [shape = 'f32[1,1]{1,0:T(1,128)S(1)}', space=vmem, size = 0x200, scoped, tag = 'scoped memory for critic_forward.1']
  %s0 = inlined_call_operand.hbm [shape: bf16[8,32], index: 0, kind: input, shape index: {}]
  %s1 = inlined_call_operand.hbm [shape: bf16[32,512], index: 1, kind: input, shape index: {}]
  %s2 = inlined_call_operand.hbm [shape: f32[1,512], index: 2, kind: input, shape index: {}]
  %s3 = inlined_call_operand.hbm [shape: bf16[512,256], index: 3, kind: input, shape index: {}]
  %s4 = inlined_call_operand.vmem [shape: f32[1,256], index: 4, kind: input, shape index: {}]
  %s5 = inlined_call_operand.hbm [shape: bf16[256,128], index: 5, kind: input, shape index: {}]
  %s6 = inlined_call_operand.vmem [shape: f32[1,128], index: 6, kind: input, shape index: {}]
  %s7 = inlined_call_operand.vmem [shape: f32[1,128], index: 7, kind: input, shape index: {}]
  %s8 = inlined_call_operand.<no memory space> [shape: f32[1,1], index: 8, kind: input, shape index: {}]
  %s9 = inlined_call_operand.vmem [shape: f32[8,1], index: 9, kind: output, shape index: {}]
  %s10 = sld [smem:[#allocation0]]
  $region66: #{critic_forward.1} parent=0
    _
  %s12 = ssub.s32 1, %s10
  %s13 = scalar_select 0, %s12, %s10
  %v14 = vstv %s8
  %15 = vst [vmem:[#allocation2] sm:$0x1] %v14
  $region1: #{critic_forward.1} parent=0
    #allocation3 [shape = 'u8[2048]{0}', space=vmem, size = 0x800, scoped, tag = 'input window, operand 0, single buffered']
    #allocation4 [shape = 's32[1]{0}', space=sflag, size = 0x4, scoped, tag = 'scoped memory for critic_forward.1']
    #allocation5 [shape = 'u8[32768]{0}', space=vmem, size = 0x8000, scoped, tag = 'input window, operand 1, single buffered']
    #allocation6 [shape = 's32[1]{0}', space=sflag, size = 0x4, scoped, tag = 'scoped memory for critic_forward.1']
    #allocation7 [shape = 'u8[2048]{0}', space=vmem, size = 0x800, scoped, tag = 'input window, operand 2, single buffered']
    #allocation8 [shape = 'u8[262144]{0}', space=vmem, size = 0x40000, scoped, tag = 'input window, operand 3, single buffered']
    #allocation9 [shape = 's32[1]{0}', space=sflag, size = 0x4, scoped, tag = 'scoped memory for critic_forward.1']
    #allocation10 [shape = 'u8[65536]{0}', space=vmem, size = 0x10000, scoped, tag = 'input window, operand 5, single buffered']
    %16 = vsyncpa [#allocation4], 0
    %17 = vsyncpa [#allocation6], 0
    %18 = vsyncpa [#allocation9], 0
    // Predicated region
    $region2: #{critic_forward.1} parent=1 // pred_check
      _
    $region3: #{critic_forward.1} parent=1 // pred_check_branch
      %20 = sbr.rel (0) target = $region5
    $region4: #{critic_forward.1} parent=1 // pred_region
      %22 = vsyncadd [#allocation4], 0
      %s24 = sshll.u32 %s0, 4
      %s25 = int_to_ptr.hbm [resolvable:$true] %s24
      %s26 = sshll.u32 [#allocation3], 4
      %s27 = int_to_ptr.vmem [resolvable:$true] %s26
      %29 = dma.hbm_to_vmem [thread:$0]  %s25, 64, %s27, [#allocation4]
    $region5: #{critic_forward.1} parent=1 // pred_fallthru
      _
    // Predicated region
    $region6: #{critic_forward.1} parent=1 // pred_check
      _
    $region7: #{critic_forward.1} parent=1 // pred_check_branch
      %31 = sbr.rel (0) target = $region9
    $region8: #{critic_forward.1} parent=1 // pred_region
      %33 = vsyncadd [#allocation6], 0
      %s34 = sshll.u32 %s1, 4
      %s35 = int_to_ptr.hbm [resolvable:$true] %s34
      %s36 = sshll.u32 [#allocation5], 4
      %s37 = int_to_ptr.vmem [resolvable:$true] %s36
      %42 = dma.hbm_to_vmem [thread:$0]  %s35, 1024, %s37, [#allocation6], 256, 256, 16
    $region9: #{critic_forward.1} parent=1 // pred_fallthru
      _
    // Predicated region
    $region10: #{critic_forward.1} parent=1 // pred_check
      _
    $region11: #{critic_forward.1} parent=1 // pred_check_branch
      %44 = sbr.rel (0) target = $region13
    $region12: #{critic_forward.1} parent=1 // pred_region
      %46 = vsyncadd [#allocation6], 0
      %s48 = sshll.u32 %s2, 4
      %s49 = int_to_ptr.hbm [resolvable:$true] %s48
      %s50 = sshll.u32 [#allocation7], 4
      %s51 = int_to_ptr.vmem [resolvable:$true] %s50
      %53 = dma.hbm_to_vmem [thread:$0]  %s49, 64, %s51, [#allocation6]
    $region13: #{critic_forward.1} parent=1 // pred_fallthru
      _
    // Predicated region
    $region14: #{critic_forward.1} parent=1 // pred_check
      _
    $region15: #{critic_forward.1} parent=1 // pred_check_branch
      %55 = sbr.rel (0) target = $region17
    $region16: #{critic_forward.1} parent=1 // pred_region
      %57 = vsyncadd [#allocation9], 0
      %s58 = sshll.u32 %s3, 4
      %s59 = int_to_ptr.hbm [resolvable:$true] %s58
      %s60 = sshll.u32 [#allocation8], 4
      %s61 = int_to_ptr.vmem [resolvable:$true] %s60
      %66 = dma.hbm_to_vmem [thread:$0]  %s59, 8192, %s61, [#allocation9], 128, 128, 8
    $region17: #{critic_forward.1} parent=1 // pred_fallthru
      _
    // Predicated region
    $region18: #{critic_forward.1} parent=1 // pred_check
      _
    $region19: #{critic_forward.1} parent=1 // pred_check_branch
      %68 = sbr.rel (0) target = $region21
    $region20: #{critic_forward.1} parent=1 // pred_region
      _
    $region21: #{critic_forward.1} parent=1 // pred_fallthru
      _
    // Predicated region
    $region22: #{critic_forward.1} parent=1 // pred_check
      _
    $region23: #{critic_forward.1} parent=1 // pred_check_branch
      %70 = sbr.rel (0) target = $region25
    $region24: #{critic_forward.1} parent=1 // pred_region
      %72 = vsyncadd [#allocation9], 0
      %s73 = sshll.u32 %s5, 4
      %s74 = int_to_ptr.hbm [resolvable:$true] %s73
      %s75 = sshll.u32 [#allocation10], 4
      %s76 = int_to_ptr.vmem [resolvable:$true] %s75
      %81 = dma.hbm_to_vmem [thread:$0]  %s74, 2048, %s76, [#allocation9], 64, 64, 4
    $region25: #{critic_forward.1} parent=1 // pred_fallthru
      _
    // Predicated region
    $region26: #{critic_forward.1} parent=1 // pred_check
      _
    $region27: #{critic_forward.1} parent=1 // pred_check_branch
      %83 = sbr.rel (0) target = $region29
    $region28: #{critic_forward.1} parent=1 // pred_region
      _
    $region29: #{critic_forward.1} parent=1 // pred_fallthru
      _
    // Predicated region
    $region30: #{critic_forward.1} parent=1 // pred_check
      _
    $region31: #{critic_forward.1} parent=1 // pred_check_branch
      %85 = sbr.rel (0) target = $region33
    $region32: #{critic_forward.1} parent=1 // pred_region
      _
    $region33: #{critic_forward.1} parent=1 // pred_fallthru
      _
    // Predicated region
    $region34: #{critic_forward.1} parent=1 // pred_check
      _
    $region35: #{critic_forward.1} parent=1 // pred_check_branch
      %87 = sbr.rel (0) target = $region37
    $region36: #{critic_forward.1} parent=1 // pred_region
      _
    $region37: #{critic_forward.1} parent=1 // pred_fallthru
      _
    // Predicated region
    $region38: #{critic_forward.1} parent=1 // pred_check
      _
    $region39: #{critic_forward.1} parent=1 // pred_check_branch
      %89 = sbr.rel (0) target = $region41
    $region40: #{critic_forward.1} parent=1 // pred_region
      %91 = dma.done [#allocation4], 64
    $region41: #{critic_forward.1} parent=1 // pred_fallthru
      _
    // Predicated region
    $region42: #{critic_forward.1} parent=1 // pred_check
      _
    $region43: #{critic_forward.1} parent=1 // pred_check_branch
      %93 = sbr.rel (0) target = $region45
    $region44: #{critic_forward.1} parent=1 // pred_region
      %95 = dma.done [#allocation6], 1024
    $region45: #{critic_forward.1} parent=1 // pred_fallthru
      _
    // Predicated region
    $region46: #{critic_forward.1} parent=1 // pred_check
      _
    $region47: #{critic_forward.1} parent=1 // pred_check_branch
      %97 = sbr.rel (0) target = $region49
    $region48: #{critic_forward.1} parent=1 // pred_region
      %99 = dma.done [#allocation6], 64
    $region49: #{critic_forward.1} parent=1 // pred_fallthru
      _
    // Predicated region
    $region50: #{critic_forward.1} parent=1 // pred_check
      _
    $region51: #{critic_forward.1} parent=1 // pred_check_branch
      %101 = sbr.rel (0) target = $region53
    $region52: #{critic_forward.1} parent=1 // pred_region
      %103 = dma.done [#allocation9], 8192
    $region53: #{critic_forward.1} parent=1 // pred_fallthru
      _
    // Predicated region
    $region54: #{critic_forward.1} parent=1 // pred_check
      _
    $region55: #{critic_forward.1} parent=1 // pred_check_branch
      %105 = sbr.rel (0) target = $region57
    $region56: #{critic_forward.1} parent=1 // pred_region
      %107 = dma.done [#allocation9], 2048
    $region57: #{critic_forward.1} parent=1 // pred_fallthru
      _
    %v109 = vld [vmem:[#allocation3] sm:$0xf]
    %v110 = vld [vmem:[#allocation5] sm:$0xff]
    %v111 = vld [vmem:[#allocation5 + $0x8] sm:$0xff]
    %v112 = vld [vmem:[#allocation5 + $0x10] sm:$0xff]
    %v113 = vld [vmem:[#allocation5 + $0x18] sm:$0xff]
    %v114 = vld [vmem:[#allocation5 + $0x20] sm:$0xff]
    %v115 = vld [vmem:[#allocation5 + $0x28] sm:$0xff]
    %v116 = vld [vmem:[#allocation5 + $0x30] sm:$0xff]
    %v117 = vld [vmem:[#allocation5 + $0x38] sm:$0xff]
    %v126 = vunpack.c.l.b16 %v110
    %v127 = vunpack.c.h.b16 %v110
    %v128 = vunpack.c.l.b16 %v111
    %v129 = vunpack.c.h.b16 %v111
    %v130 = vunpack.c.l.b16 %v112
    %v131 = vunpack.c.h.b16 %v112
    %v132 = vunpack.c.l.b16 %v113
    %v133 = vunpack.c.h.b16 %v113
    %v134 = vunpack.c.l.b16 %v114
    %v135 = vunpack.c.h.b16 %v114
    %v136 = vunpack.c.l.b16 %v115
    %v137 = vunpack.c.h.b16 %v115
    %v138 = vunpack.c.l.b16 %v116
    %v139 = vunpack.c.h.b16 %v116
    %v140 = vunpack.c.l.b16 %v117
    %v141 = vunpack.c.h.b16 %v117
    %v142 = vpack.c.b16 %v130, %v126
    %v143 = vpack.c.b16 %v131, %v127
    %v144 = vpack.c.b16 %v132, %v128
    %v145 = vpack.c.b16 %v133, %v129
    %v146 = vpack.c.b16 %v138, %v134
    %v147 = vpack.c.b16 %v139, %v135
    %v148 = vpack.c.b16 %v140, %v136
    %v149 = vpack.c.b16 %v141, %v137
    %vm158 = vcmask 261120
    %v160 = vsel %vm158, %v109, 0
    %162 = vmatpush.bf16.msra.mxu0 0
    %163 = vmatpush.bf16.msra.mxu0 0
    %164 = vmatpush.bf16.msra.mxu0 0
    %165 = vmatpush.bf16.msra.mxu0 0
    %166 = vmatpush.bf16.msra.mxu0 0
    %167 = vmatpush.bf16.msra.mxu0 0
    %168 = vmatpush.bf16.msra.mxu0 %v146
    %169 = vmatpush.bf16.msra.mxu0 %v142
    %170 = vmatmul.bf16.gmra.mxu0 %v160
    %v171 = vpop.f32.mrf.mxu0
    %v172 = vadd.f32 0.0, %v171
    %v173 = vpop.f32.mrf.mxu0
    %174 = vdwg.mxu0
    %175 = vmatpush.bf16.msra.mxu0 0
    %176 = vmatpush.bf16.msra.mxu0 0
    %177 = vmatpush.bf16.msra.mxu0 0
    %178 = vmatpush.bf16.msra.mxu0 0
    %179 = vmatpush.bf16.msra.mxu0 0
    %180 = vmatpush.bf16.msra.mxu0 0
    %181 = vmatpush.bf16.msra.mxu0 %v147
    %182 = vmatpush.bf16.msra.mxu0 %v143
    %183 = vmatmul.bf16.gmra.mxu0 %v160
    %v184 = vpop.f32.mrf.mxu0
    %v185 = vadd.f32 0.0, %v184
    %v186 = vpop.f32.mrf.mxu0
    %187 = vdwg.mxu0
    %188 = vmatpush.bf16.msra.mxu0 0
    %189 = vmatpush.bf16.msra.mxu0 0
    %190 = vmatpush.bf16.msra.mxu0 0
    %191 = vmatpush.bf16.msra.mxu0 0
    %192 = vmatpush.bf16.msra.mxu0 0
    %193 = vmatpush.bf16.msra.mxu0 0
    %194 = vmatpush.bf16.msra.mxu0 %v148
    %195 = vmatpush.bf16.msra.mxu0 %v144
    %196 = vmatmul.bf16.gmra.mxu0 %v160
    %v197 = vpop.f32.mrf.mxu0
    %v198 = vadd.f32 0.0, %v197
    %v199 = vpop.f32.mrf.mxu0
    %200 = vdwg.mxu0
    %201 = vmatpush.bf16.msra.mxu0 0
    %202 = vmatpush.bf16.msra.mxu0 0
    %203 = vmatpush.bf16.msra.mxu0 0
    %204 = vmatpush.bf16.msra.mxu0 0
    %205 = vmatpush.bf16.msra.mxu0 0
    %206 = vmatpush.bf16.msra.mxu0 0
    %207 = vmatpush.bf16.msra.mxu0 %v149
    %208 = vmatpush.bf16.msra.mxu0 %v145
    %209 = vmatmul.bf16.gmra.mxu0 %v160
    %v210 = vpop.f32.mrf.mxu0
    %v211 = vadd.f32 0.0, %v210
    %v212 = vpop.f32.mrf.mxu0
    %213 = vdwg.mxu0
    %v214 = vpack.c.bf16 %v185, %v172
    %v215 = vpack.c.bf16 %v211, %v198
    %v216 = vld [vmem:[#allocation7] sm:$0xf]
    %v218 = vperm.slane %v216, 0
    %v219 = vperm.slane %v216, 1
    %v220 = vperm.slane %v216, 2
    %v221 = vperm.slane %v216, 3
    %v226 = vpack.c.bf16 %v219, %v218
    %v227 = vpack.c.bf16 %v221, %v220
    %v230 = vunpack.c.l.b16 %v226
    %v231 = vunpack.c.h.b16 %v226
    %v232 = vunpack.c.l.b16 %v227
    %v233 = vunpack.c.h.b16 %v227
    %v234 = vpack.c.b16 %v230, %v230
    %v235 = vpack.c.b16 %v231, %v231
    %v236 = vpack.c.b16 %v232, %v232
    %v237 = vpack.c.b16 %v233, %v233
    %v239 = vpack.i.b16 %v234, %v234
    %v241 = vperm.slane %v239, 0
    %v243 = vpack.i.b16 %v235, %v235
    %v245 = vperm.slane %v243, 0
    %v247 = vpack.i.b16 %v236, %v236
    %v249 = vperm.slane %v247, 0
    %v251 = vpack.i.b16 %v237, %v237
    %v253 = vperm.slane %v251, 0
    %v254 = vunpack.c.l.bf16 %v214
    %v255 = vunpack.c.h.bf16 %v214
    %v256 = vunpack.c.l.bf16 %v215
    %v257 = vunpack.c.h.bf16 %v215
    %v258 = vunpack.c.l.bf16 %v241
    %v259 = vunpack.c.l.bf16 %v245
    %v260 = vunpack.c.l.bf16 %v249
    %v261 = vunpack.c.l.bf16 %v253
    %v262 = vadd.f32 %v254, %v258
    %v263 = vadd.f32 %v255, %v259
    %v264 = vadd.f32 %v256, %v260
    %v265 = vadd.f32 %v257, %v261
    %v266 = vpack.c.bf16 %v263, %v262
    %v267 = vpack.c.bf16 %v265, %v264
    %v268 = vunpack.c.l.bf16 %v266
    %v269 = vunpack.c.h.bf16 %v266
    %v270 = vunpack.c.l.bf16 %v267
    %v271 = vunpack.c.h.bf16 %v267
    %v272 = vmax.f32 %v268, 0.0
    %v273 = vmax.f32 %v269, 0.0
    %v274 = vmax.f32 %v270, 0.0
    %v275 = vmax.f32 %v271, 0.0
    %v276 = vpack.c.bf16 %v272, %v272
    %v277 = vpack.c.bf16 %v273, %v273
    %v278 = vpack.c.bf16 %v274, %v274
    %v279 = vpack.c.bf16 %v275, %v275
    %v280 = vld [vmem:[#allocation8] sm:$0xff]
    %v281 = vld [vmem:[#allocation8 + $0x8] sm:$0xff]
    %v282 = vld [vmem:[#allocation8 + $0x10] sm:$0xff]
    %v283 = vld [vmem:[#allocation8 + $0x18] sm:$0xff]
    %v284 = vld [vmem:[#allocation8 + $0x20] sm:$0xff]
    %v285 = vld [vmem:[#allocation8 + $0x28] sm:$0xff]
    %v286 = vld [vmem:[#allocation8 + $0x30] sm:$0xff]
    %v287 = vld [vmem:[#allocation8 + $0x38] sm:$0xff]
    %v288 = vld [vmem:[#allocation8 + $0x40] sm:$0xff]
    %v289 = vld [vmem:[#allocation8 + $0x48] sm:$0xff]
    %v290 = vld [vmem:[#allocation8 + $0x50] sm:$0xff]
    %v291 = vld [vmem:[#allocation8 + $0x58] sm:$0xff]
    %v292 = vld [vmem:[#allocation8 + $0x60] sm:$0xff]
    %v293 = vld [vmem:[#allocation8 + $0x68] sm:$0xff]
    %v294 = vld [vmem:[#allocation8 + $0x70] sm:$0xff]
    %v295 = vld [vmem:[#allocation8 + $0x78] sm:$0xff]
    %v296 = vld [vmem:[#allocation8 + $0x80] sm:$0xff]
    %v297 = vld [vmem:[#allocation8 + $0x88] sm:$0xff]
    %v298 = vld [vmem:[#allocation8 + $0x90] sm:$0xff]
    %v299 = vld [vmem:[#allocation8 + $0x98] sm:$0xff]
    %v300 = vld [vmem:[#allocation8 + $0xa0] sm:$0xff]
    %v301 = vld [vmem:[#allocation8 + $0xa8] sm:$0xff]
    %v302 = vld [vmem:[#allocation8 + $0xb0] sm:$0xff]
    %v303 = vld [vmem:[#allocation8 + $0xb8] sm:$0xff]
    %v304 = vld [vmem:[#allocation8 + $0xc0] sm:$0xff]
    %v305 = vld [vmem:[#allocation8 + $0xc8] sm:$0xff]
    %v306 = vld [vmem:[#allocation8 + $0xd0] sm:$0xff]
    %v307 = vld [vmem:[#allocation8 + $0xd8] sm:$0xff]
    %v308 = vld [vmem:[#allocation8 + $0xe0] sm:$0xff]
    %v309 = vld [vmem:[#allocation8 + $0xe8] sm:$0xff]
    %v310 = vld [vmem:[#allocation8 + $0xf0] sm:$0xff]
    %v311 = vld [vmem:[#allocation8 + $0xf8] sm:$0xff]
    %v312 = vld [vmem:[#allocation8 + $0x100] sm:$0xff]
    %v313 = vld [vmem:[#allocation8 + $0x108] sm:$0xff]
    %v314 = vld [vmem:[#allocation8 + $0x110] sm:$0xff]
    %v315 = vld [vmem:[#allocation8 + $0x118] sm:$0xff]
    %v316 = vld [vmem:[#allocation8 + $0x120] sm:$0xff]
    %v317 = vld [vmem:[#allocation8 + $0x128] sm:$0xff]
    %v318 = vld [vmem:[#allocation8 + $0x130] sm:$0xff]
    %v319 = vld [vmem:[#allocation8 + $0x138] sm:$0xff]
    %v320 = vld [vmem:[#allocation8 + $0x140] sm:$0xff]
    %v321 = vld [vmem:[#allocation8 + $0x148] sm:$0xff]
    %v322 = vld [vmem:[#allocation8 + $0x150] sm:$0xff]
    %v323 = vld [vmem:[#allocation8 + $0x158] sm:$0xff]
    %v324 = vld [vmem:[#allocation8 + $0x160] sm:$0xff]
    %v325 = vld [vmem:[#allocation8 + $0x168] sm:$0xff]
    %v326 = vld [vmem:[#allocation8 + $0x170] sm:$0xff]
    %v327 = vld [vmem:[#allocation8 + $0x178] sm:$0xff]
    %v328 = vld [vmem:[#allocation8 + $0x180] sm:$0xff]
    %v329 = vld [vmem:[#allocation8 + $0x188] sm:$0xff]
    %v330 = vld [vmem:[#allocation8 + $0x190] sm:$0xff]
    %v331 = vld [vmem:[#allocation8 + $0x198] sm:$0xff]
    %v332 = vld [vmem:[#allocation8 + $0x1a0] sm:$0xff]
    %v333 = vld [vmem:[#allocation8 + $0x1a8] sm:$0xff]
    %v334 = vld [vmem:[#allocation8 + $0x1b0] sm:$0xff]
    %v335 = vld [vmem:[#allocation8 + $0x1b8] sm:$0xff]
    %v336 = vld [vmem:[#allocation8 + $0x1c0] sm:$0xff]
    %v337 = vld [vmem:[#allocation8 + $0x1c8] sm:$0xff]
    %v338 = vld [vmem:[#allocation8 + $0x1d0] sm:$0xff]
    %v339 = vld [vmem:[#allocation8 + $0x1d8] sm:$0xff]
    %v340 = vld [vmem:[#allocation8 + $0x1e0] sm:$0xff]
    %v341 = vld [vmem:[#allocation8 + $0x1e8] sm:$0xff]
    %v342 = vld [vmem:[#allocation8 + $0x1f0] sm:$0xff]
    %v343 = vld [vmem:[#allocation8 + $0x1f8] sm:$0xff]
    %v408 = vunpack.c.l.b16 %v280
    %v409 = vunpack.c.h.b16 %v280
    %v410 = vunpack.c.l.b16 %v281
    %v411 = vunpack.c.h.b16 %v281
    %v412 = vunpack.c.l.b16 %v282
    %v413 = vunpack.c.h.b16 %v282
    %v414 = vunpack.c.l.b16 %v283
    %v415 = vunpack.c.h.b16 %v283
    %v416 = vunpack.c.l.b16 %v284
    %v417 = vunpack.c.h.b16 %v284
    %v418 = vunpack.c.l.b16 %v285
    %v419 = vunpack.c.h.b16 %v285
    %v420 = vunpack.c.l.b16 %v286
    %v421 = vunpack.c.h.b16 %v286
    %v422 = vunpack.c.l.b16 %v287
    %v423 = vunpack.c.h.b16 %v287
    %v424 = vunpack.c.l.b16 %v288
    %v425 = vunpack.c.h.b16 %v288
    %v426 = vunpack.c.l.b16 %v289
    %v427 = vunpack.c.h.b16 %v289
    %v428 = vunpack.c.l.b16 %v290
    %v429 = vunpack.c.h.b16 %v290
    %v430 = vunpack.c.l.b16 %v291
    %v431 = vunpack.c.h.b16 %v291
    %v432 = vunpack.c.l.b16 %v292
    %v433 = vunpack.c.h.b16 %v292
    %v434 = vunpack.c.l.b16 %v293
    %v435 = vunpack.c.h.b16 %v293
    %v436 = vunpack.c.l.b16 %v294
    %v437 = vunpack.c.h.b16 %v294
    %v438 = vunpack.c.l.b16 %v295
    %v439 = vunpack.c.h.b16 %v295
    %v440 = vunpack.c.l.b16 %v296
    %v441 = vunpack.c.h.b16 %v296
    %v442 = vunpack.c.l.b16 %v297
    %v443 = vunpack.c.h.b16 %v297
    %v444 = vunpack.c.l.b16 %v298
    %v445 = vunpack.c.h.b16 %v298
    %v446 = vunpack.c.l.b16 %v299
    %v447 = vunpack.c.h.b16 %v299
    %v448 = vunpack.c.l.b16 %v300
    %v449 = vunpack.c.h.b16 %v300
    %v450 = vunpack.c.l.b16 %v301
    %v451 = vunpack.c.h.b16 %v301
    %v452 = vunpack.c.l.b16 %v302
    %v453 = vunpack.c.h.b16 %v302
    %v454 = vunpack.c.l.b16 %v303
    %v455 = vunpack.c.h.b16 %v303
    %v456 = vunpack.c.l.b16 %v304
    %v457 = vunpack.c.h.b16 %v304
    %v458 = vunpack.c.l.b16 %v305
    %v459 = vunpack.c.h.b16 %v305
    %v460 = vunpack.c.l.b16 %v306
    %v461 = vunpack.c.h.b16 %v306
    %v462 = vunpack.c.l.b16 %v307
    %v463 = vunpack.c.h.b16 %v307
    %v464 = vunpack.c.l.b16 %v308
    %v465 = vunpack.c.h.b16 %v308
    %v466 = vunpack.c.l.b16 %v309
    %v467 = vunpack.c.h.b16 %v309
    %v468 = vunpack.c.l.b16 %v310
    %v469 = vunpack.c.h.b16 %v310
    %v470 = vunpack.c.l.b16 %v311
    %v471 = vunpack.c.h.b16 %v311
    %v472 = vunpack.c.l.b16 %v312
    %v473 = vunpack.c.h.b16 %v312
    %v474 = vunpack.c.l.b16 %v313
    %v475 = vunpack.c.h.b16 %v313
    %v476 = vunpack.c.l.b16 %v314
    %v477 = vunpack.c.h.b16 %v314
    %v478 = vunpack.c.l.b16 %v315
    %v479 = vunpack.c.h.b16 %v315
    %v480 = vunpack.c.l.b16 %v316
    %v481 = vunpack.c.h.b16 %v316
    %v482 = vunpack.c.l.b16 %v317
    %v483 = vunpack.c.h.b16 %v317
    %v484 = vunpack.c.l.b16 %v318
    %v485 = vunpack.c.h.b16 %v318
    %v486 = vunpack.c.l.b16 %v319
    %v487 = vunpack.c.h.b16 %v319
    %v488 = vunpack.c.l.b16 %v320
    %v489 = vunpack.c.h.b16 %v320
    %v490 = vunpack.c.l.b16 %v321
    %v491 = vunpack.c.h.b16 %v321
    %v492 = vunpack.c.l.b16 %v322
    %v493 = vunpack.c.h.b16 %v322
    %v494 = vunpack.c.l.b16 %v323
    %v495 = vunpack.c.h.b16 %v323
    %v496 = vunpack.c.l.b16 %v324
    %v497 = vunpack.c.h.b16 %v324
    %v498 = vunpack.c.l.b16 %v325
    %v499 = vunpack.c.h.b16 %v325
    %v500 = vunpack.c.l.b16 %v326
    %v501 = vunpack.c.h.b16 %v326
    %v502 = vunpack.c.l.b16 %v327
    %v503 = vunpack.c.h.b16 %v327
    %v504 = vunpack.c.l.b16 %v328
    %v505 = vunpack.c.h.b16 %v328
    %v506 = vunpack.c.l.b16 %v329
    %v507 = vunpack.c.h.b16 %v329
    %v508 = vunpack.c.l.b16 %v330
    %v509 = vunpack.c.h.b16 %v330
    %v510 = vunpack.c.l.b16 %v331
    %v511 = vunpack.c.h.b16 %v331
    %v512 = vunpack.c.l.b16 %v332
    %v513 = vunpack.c.h.b16 %v332
    %v514 = vunpack.c.l.b16 %v333
    %v515 = vunpack.c.h.b16 %v333
    %v516 = vunpack.c.l.b16 %v334
    %v517 = vunpack.c.h.b16 %v334
    %v518 = vunpack.c.l.b16 %v335
    %v519 = vunpack.c.h.b16 %v335
    %v520 = vunpack.c.l.b16 %v336
    %v521 = vunpack.c.h.b16 %v336
    %v522 = vunpack.c.l.b16 %v337
    %v523 = vunpack.c.h.b16 %v337
    %v524 = vunpack.c.l.b16 %v338
    %v525 = vunpack.c.h.b16 %v338
    %v526 = vunpack.c.l.b16 %v339
    %v527 = vunpack.c.h.b16 %v339
    %v528 = vunpack.c.l.b16 %v340
    %v529 = vunpack.c.h.b16 %v340
    %v530 = vunpack.c.l.b16 %v341
    %v531 = vunpack.c.h.b16 %v341
    %v532 = vunpack.c.l.b16 %v342
    %v533 = vunpack.c.h.b16 %v342
    %v534 = vunpack.c.l.b16 %v343
    %v535 = vunpack.c.h.b16 %v343
    %v536 = vpack.c.b16 %v410, %v408
    %v537 = vpack.c.b16 %v411, %v409
    %v538 = vpack.c.b16 %v414, %v412
    %v539 = vpack.c.b16 %v415, %v413
    %v540 = vpack.c.b16 %v418, %v416
    %v541 = vpack.c.b16 %v419, %v417
    %v542 = vpack.c.b16 %v422, %v420
    %v543 = vpack.c.b16 %v423, %v421
    %v544 = vpack.c.b16 %v426, %v424
    %v545 = vpack.c.b16 %v427, %v425
    %v546 = vpack.c.b16 %v430, %v428
    %v547 = vpack.c.b16 %v431, %v429
    %v548 = vpack.c.b16 %v434, %v432
    %v549 = vpack.c.b16 %v435, %v433
    %v550 = vpack.c.b16 %v438, %v436
    %v551 = vpack.c.b16 %v439, %v437
    %v552 = vpack.c.b16 %v442, %v440
    %v553 = vpack.c.b16 %v443, %v441
    %v554 = vpack.c.b16 %v446, %v444
    %v555 = vpack.c.b16 %v447, %v445
    %v556 = vpack.c.b16 %v450, %v448
    %v557 = vpack.c.b16 %v451, %v449
    %v558 = vpack.c.b16 %v454, %v452
    %v559 = vpack.c.b16 %v455, %v453
    %v560 = vpack.c.b16 %v458, %v456
    %v561 = vpack.c.b16 %v459, %v457
    %v562 = vpack.c.b16 %v462, %v460
    %v563 = vpack.c.b16 %v463, %v461
    %v564 = vpack.c.b16 %v466, %v464
    %v565 = vpack.c.b16 %v467, %v465
    %v566 = vpack.c.b16 %v470, %v468
    %v567 = vpack.c.b16 %v471, %v469
    %v568 = vpack.c.b16 %v474, %v472
    %v569 = vpack.c.b16 %v475, %v473
    %v570 = vpack.c.b16 %v478, %v476
    %v571 = vpack.c.b16 %v479, %v477
    %v572 = vpack.c.b16 %v482, %v480
    %v573 = vpack.c.b16 %v483, %v481
    %v574 = vpack.c.b16 %v486, %v484
    %v575 = vpack.c.b16 %v487, %v485
    %v576 = vpack.c.b16 %v490, %v488
    %v577 = vpack.c.b16 %v491, %v489
    %v578 = vpack.c.b16 %v494, %v492
    %v579 = vpack.c.b16 %v495, %v493
    %v580 = vpack.c.b16 %v498, %v496
    %v581 = vpack.c.b16 %v499, %v497
    %v582 = vpack.c.b16 %v502, %v500
    %v583 = vpack.c.b16 %v503, %v501
    %v584 = vpack.c.b16 %v506, %v504
    %v585 = vpack.c.b16 %v507, %v505
    %v586 = vpack.c.b16 %v510, %v508
    %v587 = vpack.c.b16 %v511, %v509
    %v588 = vpack.c.b16 %v514, %v512
    %v589 = vpack.c.b16 %v515, %v513
    %v590 = vpack.c.b16 %v518, %v516
    %v591 = vpack.c.b16 %v519, %v517
    %v592 = vpack.c.b16 %v522, %v520
    %v593 = vpack.c.b16 %v523, %v521
    %v594 = vpack.c.b16 %v526, %v524
    %v595 = vpack.c.b16 %v527, %v525
    %v596 = vpack.c.b16 %v530, %v528
    %v597 = vpack.c.b16 %v531, %v529
    %v598 = vpack.c.b16 %v534, %v532
    %v599 = vpack.c.b16 %v535, %v533
    %664 = vmatpush.bf16.msra.mxu0 %v550
    %665 = vmatpush.bf16.msra.mxu0 %v548
    %666 = vmatpush.bf16.msra.mxu0 %v546
    %667 = vmatpush.bf16.msra.mxu0 %v544
    %668 = vmatpush.bf16.msra.mxu0 %v542
    %669 = vmatpush.bf16.msra.mxu0 %v540
    %670 = vmatpush.bf16.msra.mxu0 %v538
    %671 = vmatpush.bf16.msra.mxu0 %v536
    %672 = vmatmul.bf16.gmra.mxu0 %v276
    %v673 = vpop.f32.mrf.mxu0
    %v674 = vadd.f32 0.0, %v673
    %v675 = vpop.f32.mrf.mxu0
    %676 = vdwg.mxu0
    %677 = vmatpush.bf16.msra.mxu0 %v566
    %678 = vmatpush.bf16.msra.mxu0 %v564
    %679 = vmatpush.bf16.msra.mxu0 %v562
    %680 = vmatpush.bf16.msra.mxu0 %v560
    %681 = vmatpush.bf16.msra.mxu0 %v558
    %682 = vmatpush.bf16.msra.mxu0 %v556
    %683 = vmatpush.bf16.msra.mxu0 %v554
    %684 = vmatpush.bf16.msra.mxu0 %v552
    %685 = vmatmul.bf16.gmra.mxu0 %v277
    %v686 = vpop.f32.mrf.mxu0
    %v687 = vadd.f32 %v674, %v686
    %v688 = vpop.f32.mrf.mxu0
    %689 = vdwg.mxu0
    %690 = vmatpush.bf16.msra.mxu0 %v582
    %691 = vmatpush.bf16.msra.mxu0 %v580
    %692 = vmatpush.bf16.msra.mxu0 %v578
    %693 = vmatpush.bf16.msra.mxu0 %v576
    %694 = vmatpush.bf16.msra.mxu0 %v574
    %695 = vmatpush.bf16.msra.mxu0 %v572
    %696 = vmatpush.bf16.msra.mxu0 %v570
    %697 = vmatpush.bf16.msra.mxu0 %v568
    %698 = vmatmul.bf16.gmra.mxu0 %v278
    %v699 = vpop.f32.mrf.mxu0
    %v700 = vadd.f32 %v687, %v699
    %v701 = vpop.f32.mrf.mxu0
    %702 = vdwg.mxu0
    %703 = vmatpush.bf16.msra.mxu0 %v598
    %704 = vmatpush.bf16.msra.mxu0 %v596
    %705 = vmatpush.bf16.msra.mxu0 %v594
    %706 = vmatpush.bf16.msra.mxu0 %v592
    %707 = vmatpush.bf16.msra.mxu0 %v590
    %708 = vmatpush.bf16.msra.mxu0 %v588
    %709 = vmatpush.bf16.msra.mxu0 %v586
    %710 = vmatpush.bf16.msra.mxu0 %v584
    %711 = vmatmul.bf16.gmra.mxu0 %v279
    %v712 = vpop.f32.mrf.mxu0
    %v713 = vadd.f32 %v700, %v712
    %v714 = vpop.f32.mrf.mxu0
    %715 = vdwg.mxu0
    %716 = vmatpush.bf16.msra.mxu0 %v551
    %717 = vmatpush.bf16.msra.mxu0 %v549
    %718 = vmatpush.bf16.msra.mxu0 %v547
    %719 = vmatpush.bf16.msra.mxu0 %v545
    %720 = vmatpush.bf16.msra.mxu0 %v543
    %721 = vmatpush.bf16.msra.mxu0 %v541
    %722 = vmatpush.bf16.msra.mxu0 %v539
    %723 = vmatpush.bf16.msra.mxu0 %v537
    %724 = vmatmul.bf16.gmra.mxu0 %v276
    %v725 = vpop.f32.mrf.mxu0
    %v726 = vadd.f32 0.0, %v725
    %v727 = vpop.f32.mrf.mxu0
    %728 = vdwg.mxu0
    %729 = vmatpush.bf16.msra.mxu0 %v567
    %730 = vmatpush.bf16.msra.mxu0 %v565
    %731 = vmatpush.bf16.msra.mxu0 %v563
    %732 = vmatpush.bf16.msra.mxu0 %v561
    %733 = vmatpush.bf16.msra.mxu0 %v559
    %734 = vmatpush.bf16.msra.mxu0 %v557
    %735 = vmatpush.bf16.msra.mxu0 %v555
    %736 = vmatpush.bf16.msra.mxu0 %v553
    %737 = vmatmul.bf16.gmra.mxu0 %v277
    %v738 = vpop.f32.mrf.mxu0
    %v739 = vadd.f32 %v726, %v738
    %v740 = vpop.f32.mrf.mxu0
    %741 = vdwg.mxu0
    %742 = vmatpush.bf16.msra.mxu0 %v583
    %743 = vmatpush.bf16.msra.mxu0 %v581
    %744 = vmatpush.bf16.msra.mxu0 %v579
    %745 = vmatpush.bf16.msra.mxu0 %v577
    %746 = vmatpush.bf16.msra.mxu0 %v575
    %747 = vmatpush.bf16.msra.mxu0 %v573
    %748 = vmatpush.bf16.msra.mxu0 %v571
    %749 = vmatpush.bf16.msra.mxu0 %v569
    %750 = vmatmul.bf16.gmra.mxu0 %v278
    %v751 = vpop.f32.mrf.mxu0
    %v752 = vadd.f32 %v739, %v751
    %v753 = vpop.f32.mrf.mxu0
    %754 = vdwg.mxu0
    %755 = vmatpush.bf16.msra.mxu0 %v599
    %756 = vmatpush.bf16.msra.mxu0 %v597
    %757 = vmatpush.bf16.msra.mxu0 %v595
    %758 = vmatpush.bf16.msra.mxu0 %v593
    %759 = vmatpush.bf16.msra.mxu0 %v591
    %760 = vmatpush.bf16.msra.mxu0 %v589
    %761 = vmatpush.bf16.msra.mxu0 %v587
    %762 = vmatpush.bf16.msra.mxu0 %v585
    %763 = vmatmul.bf16.gmra.mxu0 %v279
    %v764 = vpop.f32.mrf.mxu0
    %v765 = vadd.f32 %v752, %v764
    %v766 = vpop.f32.mrf.mxu0
    %767 = vdwg.mxu0
    %v768 = vpack.c.bf16 %v765, %v713
    %v769 = vld [vmem:[%s4] sm:$0x3]
    %v771 = vperm.slane %v769, 0
    %v772 = vperm.slane %v769, 1
    %v775 = vpack.c.bf16 %v772, %v771
    %v777 = vunpack.c.l.b16 %v775
    %v778 = vunpack.c.h.b16 %v775
    %v779 = vpack.c.b16 %v777, %v777
    %v780 = vpack.c.b16 %v778, %v778
    %v782 = vpack.i.b16 %v779, %v779
    %v784 = vperm.slane %v782, 0
    %v786 = vpack.i.b16 %v780, %v780
    %v788 = vperm.slane %v786, 0
    %v789 = vunpack.c.l.bf16 %v768
    %v790 = vunpack.c.h.bf16 %v768
    %v791 = vunpack.c.l.bf16 %v784
    %v792 = vunpack.c.l.bf16 %v788
    %v793 = vadd.f32 %v789, %v791
    %v794 = vadd.f32 %v790, %v792
    %v795 = vpack.c.bf16 %v794, %v793
    %v796 = vunpack.c.l.bf16 %v795
    %v797 = vunpack.c.h.bf16 %v795
    %v798 = vmax.f32 %v796, 0.0
    %v799 = vmax.f32 %v797, 0.0
    %v800 = vpack.c.bf16 %v798, %v798
    %v801 = vpack.c.bf16 %v799, %v799
    %v802 = vld [vmem:[#allocation10] sm:$0xf]
    %v803 = vld [vmem:[#allocation10 + $0x4] sm:$0xf]
    %v804 = vld [vmem:[#allocation10 + $0x8] sm:$0xf]
    %v805 = vld [vmem:[#allocation10 + $0xc] sm:$0xf]
    %v806 = vld [vmem:[#allocation10 + $0x10] sm:$0xf]
    %v807 = vld [vmem:[#allocation10 + $0x14] sm:$0xf]
    %v808 = vld [vmem:[#allocation10 + $0x18] sm:$0xf]
    %v809 = vld [vmem:[#allocation10 + $0x1c] sm:$0xf]
    %v810 = vld [vmem:[#allocation10 + $0x20] sm:$0xf]
    %v811 = vld [vmem:[#allocation10 + $0x24] sm:$0xf]
    %v812 = vld [vmem:[#allocation10 + $0x28] sm:$0xf]
    %v813 = vld [vmem:[#allocation10 + $0x2c] sm:$0xf]
    %v814 = vld [vmem:[#allocation10 + $0x30] sm:$0xf]
    %v815 = vld [vmem:[#allocation10 + $0x34] sm:$0xf]
    %v816 = vld [vmem:[#allocation10 + $0x38] sm:$0xf]
    %v817 = vld [vmem:[#allocation10 + $0x3c] sm:$0xf]
    %v818 = vld [vmem:[#allocation10 + $0x40] sm:$0xf]
    %v819 = vld [vmem:[#allocation10 + $0x44] sm:$0xf]
    %v820 = vld [vmem:[#allocation10 + $0x48] sm:$0xf]
    %v821 = vld [vmem:[#allocation10 + $0x4c] sm:$0xf]
    %v822 = vld [vmem:[#allocation10 + $0x50] sm:$0xf]
    %v823 = vld [vmem:[#allocation10 + $0x54] sm:$0xf]
    %v824 = vld [vmem:[#allocation10 + $0x58] sm:$0xf]
    %v825 = vld [vmem:[#allocation10 + $0x5c] sm:$0xf]
    %v826 = vld [vmem:[#allocation10 + $0x60] sm:$0xf]
    %v827 = vld [vmem:[#allocation10 + $0x64] sm:$0xf]
    %v828 = vld [vmem:[#allocation10 + $0x68] sm:$0xf]
    %v829 = vld [vmem:[#allocation10 + $0x6c] sm:$0xf]
    %v830 = vld [vmem:[#allocation10 + $0x70] sm:$0xf]
    %v831 = vld [vmem:[#allocation10 + $0x74] sm:$0xf]
    %v832 = vld [vmem:[#allocation10 + $0x78] sm:$0xf]
    %v833 = vld [vmem:[#allocation10 + $0x7c] sm:$0xf]
    %v866 = vunpack.c.l.b16 %v802
    %v867 = vunpack.c.l.b16 %v803
    %v868 = vunpack.c.l.b16 %v804
    %v869 = vunpack.c.l.b16 %v805
    %v870 = vunpack.c.l.b16 %v806
    %v871 = vunpack.c.l.b16 %v807
    %v872 = vunpack.c.l.b16 %v808
    %v873 = vunpack.c.l.b16 %v809
    %v874 = vunpack.c.l.b16 %v810
    %v875 = vunpack.c.l.b16 %v811
    %v876 = vunpack.c.l.b16 %v812
    %v877 = vunpack.c.l.b16 %v813
    %v878 = vunpack.c.l.b16 %v814
    %v879 = vunpack.c.l.b16 %v815
    %v880 = vunpack.c.l.b16 %v816
    %v881 = vunpack.c.l.b16 %v817
    %v882 = vunpack.c.l.b16 %v818
    %v883 = vunpack.c.l.b16 %v819
    %v884 = vunpack.c.l.b16 %v820
    %v885 = vunpack.c.l.b16 %v821
    %v886 = vunpack.c.l.b16 %v822
    %v887 = vunpack.c.l.b16 %v823
    %v888 = vunpack.c.l.b16 %v824
    %v889 = vunpack.c.l.b16 %v825
    %v890 = vunpack.c.l.b16 %v826
    %v891 = vunpack.c.l.b16 %v827
    %v892 = vunpack.c.l.b16 %v828
    %v893 = vunpack.c.l.b16 %v829
    %v894 = vunpack.c.l.b16 %v830
    %v895 = vunpack.c.l.b16 %v831
    %v896 = vunpack.c.l.b16 %v832
    %v897 = vunpack.c.l.b16 %v833
    %v898 = vpack.c.b16 %v867, %v866
    %v899 = vpack.c.b16 %v869, %v868
    %v900 = vpack.c.b16 %v871, %v870
    %v901 = vpack.c.b16 %v873, %v872
    %v902 = vpack.c.b16 %v875, %v874
    %v903 = vpack.c.b16 %v877, %v876
    %v904 = vpack.c.b16 %v879, %v878
    %v905 = vpack.c.b16 %v881, %v880
    %v906 = vpack.c.b16 %v883, %v882
    %v907 = vpack.c.b16 %v885, %v884
    %v908 = vpack.c.b16 %v887, %v886
    %v909 = vpack.c.b16 %v889, %v888
    %v910 = vpack.c.b16 %v891, %v890
    %v911 = vpack.c.b16 %v893, %v892
    %v912 = vpack.c.b16 %v895, %v894
    %v913 = vpack.c.b16 %v897, %v896
    %930 = vmatpush.bf16.msra.mxu0 %v905
    %931 = vmatpush.bf16.msra.mxu0 %v904
    %932 = vmatpush.bf16.msra.mxu0 %v903
    %933 = vmatpush.bf16.msra.mxu0 %v902
    %934 = vmatpush.bf16.msra.mxu0 %v901
    %935 = vmatpush.bf16.msra.mxu0 %v900
    %936 = vmatpush.bf16.msra.mxu0 %v899
    %937 = vmatpush.bf16.msra.mxu0 %v898
    %938 = vmatmul.bf16.gmra.mxu0 %v800
    %v939 = vpop.f32.mrf.mxu0
    %v940 = vadd.f32 0.0, %v939
    %v941 = vpop.f32.mrf.mxu0
    %942 = vdwg.mxu0
    %943 = vmatpush.bf16.msra.mxu0 %v913
    %944 = vmatpush.bf16.msra.mxu0 %v912
    %945 = vmatpush.bf16.msra.mxu0 %v911
    %946 = vmatpush.bf16.msra.mxu0 %v910
    %947 = vmatpush.bf16.msra.mxu0 %v909
    %948 = vmatpush.bf16.msra.mxu0 %v908
    %949 = vmatpush.bf16.msra.mxu0 %v907
    %950 = vmatpush.bf16.msra.mxu0 %v906
    %951 = vmatmul.bf16.gmra.mxu0 %v801
    %v952 = vpop.f32.mrf.mxu0
    %v953 = vadd.f32 %v940, %v952
    %v954 = vpop.f32.mrf.mxu0
    %955 = vdwg.mxu0
    %v956 = vpack.c.bf16 %v953, %v953
    %v957 = vld [vmem:[%s6] sm:$0x1]
    %v958 = vpack.c.bf16 %v957, %v957
    %v960 = vpack.i.b16 %v958, %v958
    %v962 = vperm.slane %v960, 0
    %v963 = vunpack.c.l.bf16 %v956
    %v964 = vunpack.c.l.bf16 %v962
    %v965 = vadd.f32 %v963, %v964
    %v966 = vpack.c.bf16 %v965, %v965
    %v967 = vunpack.c.l.bf16 %v966
    %v968 = vmax.f32 %v967, 0.0
    %v969 = vpack.c.bf16 %v968, %v968
    %v970 = vunpack.c.l.bf16 %v969
    %v971 = vld [vmem:[%s7] sm:$0x1]
    %v973 = vperm.slane %v971, 0
    %v975 = vmul.f32 %v970, %v973
    %976 = vadd.xlane.f32.xlu0 %v975
    %v977 = vpop.xlane.xlu0 %976
    %v978 = vld [vmem:[#allocation2] sm:$0x1]
    %v980 = vperm.slane %v978, 0
    %v982 = vadd.f32 %v977, %v980
    %vm983 = vcmask 7168
    %984 = vst.msk [vmem:[%s9] sm:$0xff] %vm983, %v982
    // Predicated region
    $region58: #{critic_forward.1} parent=1 // pred_check
      _
    $region59: #{critic_forward.1} parent=1 // pred_check_branch
      %986 = sbr.rel (0) target = $region61
    $region60: #{critic_forward.1} parent=1 // pred_region
      _
    $region61: #{critic_forward.1} parent=1 // pred_fallthru
      _
    // Predicated region
    $region62: #{critic_forward.1} parent=1 // pred_check
      _
    $region63: #{critic_forward.1} parent=1 // pred_check_branch
      %988 = sbr.rel (0) target = $region65
    $region64: #{critic_forward.1} parent=1 // pred_region
      _
    $region65: #{critic_forward.1} parent=1 // pred_fallthru
      _
    %989 = vsyncpa [#allocation4], 1
    %990 = vsyncpa [#allocation6], 1
    %991 = vsyncpa [#allocation9], 1

</llo_original>
